<compile_context>
chip_gen: v6e
topology: v6e:2x2x1
jax: 0.10.0
libtpu: 0.0.40
codegen_flags: <defaults>
</compile_context>

<pallas_src>
import math

import jax
import jax.numpy as jnp
from jax.experimental import pallas as pl
from jax.experimental.pallas import tpu as pltpu

_LANE_CHOICES = (512, 256, 128)          # lane-dense last dim (multiples of 128)
_TARGET_BLOCK_BYTES = 4 * 1024 * 1024    # ~4 MiB per pipelined buffer


def _mish_kernel(x_ref, o_ref):
    x = x_ref[...].astype(jnp.float32)
    # tanh(softplus(x)) = ((1 + e^x)^2 - 1) / ((1 + e^x)^2 + 1).  With
    # u = exp(-|x|) in (0, 1] both branches are overflow/cancellation-free:
    #   x >= 0:  num = 1 + 2u          den = 1 + 2u + 2u^2
    #   x <  0:  num = u * (2 + u)     den = 2 + 2u + u^2
    u = jnp.exp(-jnp.abs(x))                    # single EUP transcendental
    u2 = u * u
    pos = x >= 0.0
    num = jnp.where(pos, 1.0 + 2.0 * u, u * (2.0 + u))
    den = jnp.where(pos, 1.0 + 2.0 * u + 2.0 * u2, 2.0 + 2.0 * u + u2)
    inv = pl.reciprocal(den, approx=True)       # EUP vrcp (free slot)
    inv = inv * (2.0 - den * inv)               # one Newton step -> ~f32 exact
    o_ref[...] = (x * num * inv).astype(o_ref.dtype)


def mish(x: jax.Array) -> jax.Array:
    """Mish forward pass; pure elementwise, any shape, floating dtypes only."""
    assert jnp.issubdtype(x.dtype, jnp.floating), (
        f"mish expects a floating dtype, got {x.dtype}")

    orig_shape = x.shape
    total = math.prod(orig_shape)
    itemsize = jnp.dtype(x.dtype).itemsize

    # Pick the widest lane count that divides the element count exactly so the
    # common case is a zero-copy reshape (no pad / slice HBM round-trips).
    lanes = next((c for c in _LANE_CHOICES if total % c == 0), None)
    flat = x.reshape(-1)
    needs_slice = False
    if lanes is None:
        lanes = 128
        n_rows = pl.cdiv(total, lanes)
        flat = jnp.pad(flat, (0, n_rows * lanes - total))  # mish(0) == 0, inert
        needs_slice = True
    else:
        n_rows = total // lanes
    x2d = flat.reshape(n_rows, lanes)

    # Block rows: ~4 MiB per buffer, multiple of 8 (ragged final block is fine
    # since the block shape itself obeys the (8, 128) rule).
    max_rows = max(8, (_TARGET_BLOCK_BYTES // (lanes * itemsize)) // 8 * 8)
    if n_rows <= max_rows:
        block_rows = n_rows        # single block spanning the full row dim
        grid = (1,)
    else:
        block_rows = max_rows
        grid = (pl.cdiv(n_rows, block_rows),)

    cost = pl.CostEstimate(
        flops=10 * total,
        transcendentals=total,
        bytes_accessed=2 * total * itemsize,
    )

    out2d = pl.pallas_call(
        _mish_kernel,
        out_shape=jax.ShapeDtypeStruct((n_rows, lanes), x.dtype),
        grid=grid,
        in_specs=[pl.BlockSpec((block_rows, lanes), lambda i: (i, 0))],
        out_specs=pl.BlockSpec((block_rows, lanes), lambda i: (i, 0)),
        compiler_params=pltpu.CompilerParams(
            dimension_semantics=("parallel",),
            vmem_limit_bytes=48 * 1024 * 1024,
        ),
        cost_estimate=cost,
    )(x2d)

    flat_out = out2d.reshape(-1)
    if needs_slice:
        flat_out = flat_out[:total]
    return flat_out.reshape(orig_shape)


if __name__ == "__main__":
    key = jax.random.PRNGKey(0)

    # Main check: NCHW activation shape (zero-copy lane path).
    x = jax.random.normal(key, (2, 4, 16, 16), dtype=jnp.float32)
    y = mish(x)
    jax.block_until_ready(y)
    y_ref = x * jnp.tanh(jax.nn.softplus(x))
    assert y.shape == x.shape and y.dtype == x.dtype
    assert jnp.allclose(y, y_ref, atol=1e-5, rtol=1e-5)

    # Secondary check: odd size exercising the padded fallback path.
    x2 = jax.random.normal(jax.random.PRNGKey(1), (3, 5, 7, 7), dtype=jnp.float32)
    y2 = mish(x2)
    jax.block_until_ready(y2)
    y2_ref = x2 * jnp.tanh(jax.nn.softplus(x2))
    assert jnp.allclose(y2, y2_ref, atol=1e-5, rtol=1e-5)

    print("KERNEL_OK")
</pallas_src>

<mosaic_0001>
module attributes {stable_mosaic.version = 11 : i64} {
  func.func @_mish_kernel(%arg0: i32, %arg1: memref<4x512xf32, #tpu.memory_space<vmem>>, %arg2: memref<4x512xf32, #tpu.memory_space<vmem>>) attributes {dimension_semantics = [#tpu.dimension_semantics<parallel>], iteration_bounds = array<i64: 1>, scalar_prefetch = 0 : i64, scratch_operands = 0 : i64, tpu.core_type = #tpu.core_type<tc>, window_params = [{transform_indices = @transform_0, window_bounds = array<i64: 4, 512>}, {transform_indices = @transform_1, window_bounds = array<i64: 4, 512>}]} {
    %c0 = arith.constant 0 : index
    %c0_0 = arith.constant 0 : index
    %0 = vector.load %arg1[%c0, %c0_0] : memref<4x512xf32, #tpu.memory_space<vmem>>, vector<4x512xf32>
    %1 = math.absf %0 : vector<4x512xf32>
    %cst = arith.constant 0.000000e+00 : f32
    %2 = vector.broadcast %cst : f32 to vector<4x512xf32>
    %3 = arith.subf %2, %1 : vector<4x512xf32>
    %4 = math.exp %3 : vector<4x512xf32>
    %5 = arith.mulf %4, %4 : vector<4x512xf32>
    %cst_1 = arith.constant 0.000000e+00 : f32
    %6 = vector.broadcast %cst_1 : f32 to vector<4x512xf32>
    %7 = arith.cmpf oge, %0, %6 : vector<4x512xf32>
    %cst_2 = arith.constant 2.000000e+00 : f32
    %8 = vector.broadcast %cst_2 : f32 to vector<4x512xf32>
    %9 = arith.mulf %8, %4 : vector<4x512xf32>
    %cst_3 = arith.constant 1.000000e+00 : f32
    %10 = vector.broadcast %cst_3 : f32 to vector<4x512xf32>
    %11 = arith.addf %10, %9 : vector<4x512xf32>
    %cst_4 = arith.constant 2.000000e+00 : f32
    %12 = vector.broadcast %cst_4 : f32 to vector<4x512xf32>
    %13 = arith.addf %12, %4 : vector<4x512xf32>
    %14 = arith.mulf %4, %13 : vector<4x512xf32>
    %15 = arith.select %7, %11, %14 : vector<4x512xi1>, vector<4x512xf32>
    %cst_5 = arith.constant 2.000000e+00 : f32
    %16 = vector.broadcast %cst_5 : f32 to vector<4x512xf32>
    %17 = arith.mulf %16, %4 : vector<4x512xf32>
    %cst_6 = arith.constant 1.000000e+00 : f32
    %18 = vector.broadcast %cst_6 : f32 to vector<4x512xf32>
    %19 = arith.addf %18, %17 : vector<4x512xf32>
    %cst_7 = arith.constant 2.000000e+00 : f32
    %20 = vector.broadcast %cst_7 : f32 to vector<4x512xf32>
    %21 = arith.mulf %20, %5 : vector<4x512xf32>
    %22 = arith.addf %19, %21 : vector<4x512xf32>
    %cst_8 = arith.constant 2.000000e+00 : f32
    %23 = vector.broadcast %cst_8 : f32 to vector<4x512xf32>
    %24 = arith.mulf %23, %4 : vector<4x512xf32>
    %cst_9 = arith.constant 2.000000e+00 : f32
    %25 = vector.broadcast %cst_9 : f32 to vector<4x512xf32>
    %26 = arith.addf %25, %24 : vector<4x512xf32>
    %27 = arith.addf %26, %5 : vector<4x512xf32>
    %28 = arith.select %7, %22, %27 : vector<4x512xi1>, vector<4x512xf32>
    %29 = tpu.reciprocal %28 {approx = true} : vector<4x512xf32> -> vector<4x512xf32>
    %30 = arith.mulf %28, %29 : vector<4x512xf32>
    %cst_10 = arith.constant 2.000000e+00 : f32
    %31 = vector.broadcast %cst_10 : f32 to vector<4x512xf32>
    %32 = arith.subf %31, %30 : vector<4x512xf32>
    %33 = arith.mulf %29, %32 : vector<4x512xf32>
    %34 = arith.mulf %0, %15 : vector<4x512xf32>
    %35 = arith.mulf %34, %33 : vector<4x512xf32>
    %c0_11 = arith.constant 0 : index
    %c0_12 = arith.constant 0 : index
    %36 = vector.load %arg2[%c0_11, %c0_12] : memref<4x512xf32, #tpu.memory_space<vmem>>, vector<4x512xf32>
    tpu.vector_store %arg2[%c0_11, %c0_12], %35 {strides = array<i32>} : memref<4x512xf32, #tpu.memory_space<vmem>>, vector<4x512xf32>,
    return
  }
  func.func @transform_0(%arg0: i32) -> (i32, i32) {
    %c0_i32 = arith.constant 0 : i32
    %c0_i32_0 = arith.constant 0 : i32
    return %arg0, %c0_i32 : i32, i32
  }
  func.func @transform_1(%arg0: i32) -> (i32, i32) {
    %c0_i32 = arith.constant 0 : i32
    %c0_i32_0 = arith.constant 0 : i32
    return %arg0, %c0_i32 : i32, i32
  }
}

</mosaic_0001>

<llo_original>
// kernel: tpu_custom_call.1
$region0: #{tpu_custom_call.1}
  #allocation0 [shape = 'u32[]', space=smem, size = 0x4, offset = 0x4, fixed_abs, tag = 'smem constant byte address 0x4 - core index']
  #allocation1 [shape = 'u32[144,128]{1,0:T(1,128)}', space=vmem, size = 0x12000, scoped, tag = 'internal scratch']
  %s0 = inlined_call_operand.hbm [shape: f32[4,512], index: 0, kind: input, shape index: {}]
  %s1 = inlined_call_operand.hbm [shape: f32[4,512], index: 1, kind: output, shape index: {}]
  %s2 = sld [smem:[#allocation0]]
  $region18: #{tpu_custom_call.1} parent=0
    _
  %s4 = ssub.s32 1, %s2
  %s5 = scalar_select 0, %s4, %s2
  $region1: #{tpu_custom_call.1} parent=0
    #allocation2 [shape = 'u8[8192]{0}', space=vmem, size = 0x2000, scoped, tag = 'input window, operand 0, single buffered']
    #allocation3 [shape = 's32[1]{0}', space=sflag, size = 0x4, scoped, tag = 'scoped memory for tpu_custom_call.1']
    #allocation4 [shape = 's32[1]{0}', space=sflag, size = 0x4, scoped, tag = 'scoped memory for tpu_custom_call.1']
    #allocation5 [shape = 'u8[8192]{0}', space=vmem, size = 0x2000, scoped, tag = 'output window, operand 0, single buffered']
    %6 = vsyncpa [#allocation3], 0
    %7 = vsyncpa [#allocation4], 0
    // Predicated region
    $region2: #{tpu_custom_call.1} parent=1 // pred_check
      _
    $region3: #{tpu_custom_call.1} parent=1 // pred_check_branch
      %9 = sbr.rel (0) target = $region5
    $region4: #{tpu_custom_call.1} parent=1 // pred_region
      %s11 = ssub.s32 256, 256
      %12 = vsyncadd [#allocation3], %s11
      %s14 = sshll.u32 [#allocation2], 4
      %s15 = int_to_ptr.vmem [resolvable:$true] %s14
      %17 = dma.hbm_to_vmem [thread:$0]  %s0, 256, %s15, [#allocation3]
    $region5: #{tpu_custom_call.1} parent=1 // pred_fallthru
      _
    // Predicated region
    $region6: #{tpu_custom_call.1} parent=1 // pred_check
      _
    $region7: #{tpu_custom_call.1} parent=1 // pred_check_branch
      %19 = sbr.rel (0) target = $region9
    $region8: #{tpu_custom_call.1} parent=1 // pred_region
      %20 = dma.done [#allocation3], 256
    $region9: #{tpu_custom_call.1} parent=1 // pred_fallthru
      _
    %v21 = vld [vmem:[#allocation2] sm:$0xff]
    %v22 = vld [vmem:[#allocation2 + $0x8] sm:$0xff]
    %v23 = vand.u32 2147483647, %v21
    %v24 = vand.u32 2147483647, %v22
    %v25 = vsub.f32 0.0, %v23
    %v26 = vsub.f32 0.0, %v24
    %v27 = vmul.f32 %v25, 1.442695
    %v28 = vpow.pop %v27
    %v29 = vmul.f32 %v26, 1.442695
    %v30 = vpow.pop %v29
    %v31 = vmul.f32 %v28, %v28
    %v32 = vmul.f32 %v30, %v30
    %vm33 = vcmp.ge.f32.partialorder %v21, 0.0
    %vm34 = vcmp.ge.f32.partialorder %v22, 0.0
    %v35 = vmul.f32 %v28, 2.0
    %v36 = vmul.f32 %v30, 2.0
    %v37 = vadd.f32 %v35, 1.0
    %v38 = vadd.f32 %v36, 1.0
    %v39 = vadd.f32 %v28, 2.0
    %v40 = vadd.f32 %v30, 2.0
    %v41 = vmul.f32 %v28, %v39
    %v42 = vmul.f32 %v30, %v40
    %v43 = vsel %vm33, %v37, %v41
    %v44 = vsel %vm34, %v38, %v42
    %v45 = vmul.f32 %v31, 2.0
    %v46 = vmul.f32 %v32, 2.0
    %v47 = vadd.f32 %v37, %v45
    %v48 = vadd.f32 %v38, %v46
    %v49 = vadd.f32 %v35, 2.0
    %v50 = vadd.f32 %v36, 2.0
    %v51 = vadd.f32 %v49, %v31
    %v52 = vadd.f32 %v50, %v32
    %v53 = vsel %vm33, %v47, %v51
    %v54 = vsel %vm34, %v48, %v52
    %v55 = vrcp.pop %v53
    %v56 = vrcp.pop %v54
    %v57 = vmul.f32 %v53, %v55
    %v58 = vmul.f32 %v54, %v56
    %v59 = vsub.f32 2.0, %v57
    %v60 = vsub.f32 2.0, %v58
    %v61 = vmul.f32 %v55, %v59
    %v62 = vmul.f32 %v56, %v60
    %v63 = vmul.f32 %v21, %v43
    %v64 = vmul.f32 %v22, %v44
    %v65 = vmul.f32 %v63, %v61
    %v66 = vmul.f32 %v64, %v62
    %67 = vst [vmem:[#allocation5] sm:$0xff] %v65
    %68 = vst [vmem:[#allocation5 + $0x8] sm:$0xff] %v66
    // Predicated region
    $region10: #{tpu_custom_call.1} parent=1 // pred_check
      _
    $region11: #{tpu_custom_call.1} parent=1 // pred_check_branch
      %70 = sbr.rel (0) target = $region13
    $region12: #{tpu_custom_call.1} parent=1 // pred_region
      %s72 = ssub.s32 256, 256
      %73 = vsyncadd [#allocation4], %s72
      %s75 = sshll.u32 [#allocation5], 4
      %s76 = int_to_ptr.vmem [resolvable:$true] %s75
      %78 = dma.vmem_to_hbm [thread:$0]  %s76, 256, %s1, [#allocation4]
    $region13: #{tpu_custom_call.1} parent=1 // pred_fallthru
      _
    // Predicated region
    $region14: #{tpu_custom_call.1} parent=1 // pred_check
      _
    $region15: #{tpu_custom_call.1} parent=1 // pred_check_branch
      %80 = sbr.rel (0) target = $region17
    $region16: #{tpu_custom_call.1} parent=1 // pred_region
      %81 = dma.done [#allocation4], 256
    $region17: #{tpu_custom_call.1} parent=1 // pred_fallthru
      _
    %82 = vsyncpa [#allocation3], 1
    %83 = vsyncpa [#allocation4], 1

</llo_original>
